<compile_context>
chip_gen: v7x
topology: tpu7x:2x2x1
jax: 0.10.0
libtpu: 0.0.40
codegen_flags: <defaults>
</compile_context>

<pallas_src>
import functools

import jax
import jax.numpy as jnp
from jax.experimental import pallas as pl
from jax.experimental.pallas import tpu as pltpu


def _rmsnorm_kernel(x_ref, w_ref, o_ref, *, eps):
    # x_ref: (tile_rows, hidden)  w_ref: (1, hidden)  o_ref: (tile_rows, hidden)
    x_in = x_ref[...]
    x = x_in.astype(jnp.float32)                       # .to(torch.float32)
    var = jnp.mean(x * x, axis=-1, keepdims=True)      # pow(2).mean(-1, keepdim=True)
    inv = jax.lax.rsqrt(var + eps)                     # torch.rsqrt(variance + eps)
    normed = (x * inv).astype(x_in.dtype)              # .to(input_dtype)
    # w_ref is already out_dtype; the multiply promotes normed -> out_dtype.
    o_ref[...] = w_ref[...] * normed                   # weight * hidden_states


def _round_up(n, m):
    return ((n + m - 1) // m) * m


def _sublane_align(*dtypes):
    # 8 sublanes of 32-bit -> sub-32-bit dtypes pack: 16 rows for 2B, 32 for 1B.
    itemsize = min(jnp.dtype(d).itemsize for d in dtypes)
    return max(8, 32 // itemsize)


def _chip_info():
    """Returns (vmem_capacity_bytes, num_tensorcores_per_chip, is_v7x)."""
    vmem = 64 * 1024 * 1024   # conservative fallback (v7x-sized)
    try:
        info = pltpu.get_tpu_info()
        vmem = int(getattr(info, "vmem_capacity_bytes", vmem))
    except Exception:
        pass
    kind = ""
    try:
        kind = jax.devices()[0].device_kind.lower()
    except Exception:
        pass
    is_v7 = "v7" in kind
    num_tc = 2 if is_v7 else 1
    return vmem, num_tc, is_v7


def _pick_tile_rows(rows, hidden, in_dtype, out_dtype, vmem_budget_bytes, num_tc):
    in_b = jnp.dtype(in_dtype).itemsize
    out_b = jnp.dtype(out_dtype).itemsize
    align = _sublane_align(in_dtype, out_dtype)
    # Per-row VMEM cost: double-buffered input + output tiles, plus ~one full
    # f32 intermediate tile for the reduction operand (Mosaic streams the rest
    # through vregs).  vmem_limit_bytes still gates compilation.
    per_row = hidden * (2 * in_b + 2 * out_b + 4)
    max_rows = max(align, (vmem_budget_bytes // per_row) // align * align)
    # Never tile past the (row-aligned) problem size; no artificial upper cap —
    # the VMEM budget is the sole governor.
    tile = min(max_rows, _round_up(rows, align))
    # Chip-aware minimum step count: 1 per TensorCore (v5e/v6e: 1, v7x: 2).
    min_steps = num_tc
    if min_steps > 1 and rows > min_steps * align and pl.cdiv(rows, tile) < min_steps:
        tile = max(align, _round_up(pl.cdiv(rows, min_steps), align))
    # v7x (2 TCs): keep the step count even when > 1 so neither core idles on a
    # tail step.
    if num_tc == 2:
        steps = pl.cdiv(rows, tile)
        if steps > 1 and steps % 2 == 1:
            tile = max(align, _round_up(pl.cdiv(rows, steps + 1), align))
    return tile


def llama_rmsnorm(hidden_states, weight, eps=1e-6, *, tile_rows=None,
                  cast_weight_to_input_dtype=False):
    """RMSNorm over the last axis of `hidden_states`, scaled by `weight`.

    cast_weight_to_input_dtype: if True and weight is wider than the activations
    (e.g. f32 weight, bf16 activations), cast the weight down so the output stays
    in the activation dtype (HF-Llama convention; ~33% less HBM writeback).
    Default False preserves exact PyTorch promotion semantics.
    """
    orig_shape = hidden_states.shape
    hidden = orig_shape[-1]
    x2d = hidden_states.reshape(-1, hidden)
    rows = x2d.shape[0]

    if cast_weight_to_input_dtype:
        out_dtype = hidden_states.dtype
    else:
        # PyTorch promotion of weight * hidden_states.to(input_dtype).
        out_dtype = jnp.promote_types(weight.dtype, hidden_states.dtype)
    # Hoist the weight cast out of the kernel body: one cast, stays resident.
    w2d = weight.astype(out_dtype).reshape(1, hidden)

    vmem_capacity, num_tc, is_v7 = _chip_info()
    if is_v7:
        # v7x: 64 MiB/TC but 3.2 TB/s HBM -> per-step fixed cost is a bigger
        # fraction; use most of VMEM (no MXU / internal scratch in this kernel).
        vmem_budget = (vmem_capacity * 4) // 5
        vmem_limit = (vmem_capacity * 4) // 5
    else:
        vmem_budget = vmem_capacity // 2       # headroom for compiler scratch
        vmem_limit = min(vmem_capacity * 3 // 4, 100 * 1024 * 1024)

    if tile_rows is None:
        tile_rows = _pick_tile_rows(rows, hidden, x2d.dtype, out_dtype,
                                    vmem_budget, num_tc)

    grid = (pl.cdiv(rows, tile_rows),)

    in_b = jnp.dtype(x2d.dtype).itemsize
    out_b = jnp.dtype(out_dtype).itemsize
    cost = pl.CostEstimate(
        flops=6 * rows * hidden,
        transcendentals=rows,
        bytes_accessed=rows * hidden * (in_b + out_b) + hidden * out_b,
    )

    out = pl.pallas_call(
        functools.partial(_rmsnorm_kernel, eps=eps),
        out_shape=jax.ShapeDtypeStruct((rows, hidden), out_dtype),
        grid_spec=pltpu.PrefetchScalarGridSpec(
            num_scalar_prefetch=0,
            grid=grid,
            in_specs=[
                pl.BlockSpec((tile_rows, hidden), lambda i: (i, 0)),
                pl.BlockSpec((1, hidden), lambda i: (0, 0)),   # resident weight
            ],
            out_specs=pl.BlockSpec((tile_rows, hidden), lambda i: (i, 0)),
        ),
        compiler_params=pltpu.CompilerParams(
            dimension_semantics=("parallel",),
            vmem_limit_bytes=vmem_limit,
        ),
        cost_estimate=cost,
    )(x2d, w2d)

    return out.reshape(orig_shape[:-1] + (hidden,))


def _rmsnorm_ref(x, w, eps):
    xf = x.astype(jnp.float32)
    var = jnp.mean(xf * xf, axis=-1, keepdims=True)
    normed = (xf * jax.lax.rsqrt(var + eps)).astype(x.dtype)
    return w * normed


if __name__ == "__main__":
    eps = 1e-6
    key = jax.random.PRNGKey(0)
    k1, k2 = jax.random.split(key)

    # Case 1: f32 activations, f32 weight (ones, as in the PyTorch init).
    batch, seq, hidden = 2, 8, 128
    x = jax.random.normal(k1, (batch, seq, hidden), dtype=jnp.float32)
    weight = jnp.ones((hidden,), dtype=jnp.float32)
    out = jax.block_until_ready(llama_rmsnorm(x, weight, eps=eps))
    ref = _rmsnorm_ref(x, weight, eps)
    assert out.shape == x.shape and out.dtype == ref.dtype
    assert jnp.allclose(out, ref, atol=1e-5, rtol=1e-5)

    # Case 2: bf16 activations, f32 weight (mixed-precision path + out_dtype promotion).
    xb = jax.random.normal(k2, (batch, seq, hidden), dtype=jnp.float32).astype(jnp.bfloat16)
    outb = jax.block_until_ready(llama_rmsnorm(xb, weight, eps=eps))
    refb = _rmsnorm_ref(xb, weight, eps)
    assert outb.shape == xb.shape and outb.dtype == refb.dtype
    assert jnp.allclose(outb.astype(jnp.float32), refb.astype(jnp.float32),
                        atol=1e-2, rtol=1e-2)

    # Case 2b: opt-in weight downcast -> bf16 output (HF-Llama convention).
    outb2 = jax.block_until_ready(
        llama_rmsnorm(xb, weight, eps=eps, cast_weight_to_input_dtype=True))
    refb2 = _rmsnorm_ref(xb, weight.astype(jnp.bfloat16), eps)
    assert outb2.dtype == jnp.bfloat16
    assert jnp.allclose(outb2.astype(jnp.float32), refb2.astype(jnp.float32),
                        atol=1e-2, rtol=1e-2)

    # Case 3: rows not a multiple of the tile (exercises the masked partial block).
    x3 = jax.random.normal(k1, (3, 5, hidden), dtype=jnp.float32)
    out3 = jax.block_until_ready(llama_rmsnorm(x3, weight, eps=eps))
    ref3 = _rmsnorm_ref(x3, weight, eps)
    assert out3.shape == x3.shape
    assert jnp.allclose(out3, ref3, atol=1e-5, rtol=1e-5)

    print("KERNEL_OK")
</pallas_src>

<mosaic_0001>
module attributes {stable_mosaic.version = 11 : i64} {
  func.func @_rmsnorm_kernel(%arg0: i32, %arg1: memref<16x128xf32, #tpu.memory_space<vmem>>, %arg2: memref<1x128xf32, #tpu.memory_space<vmem>>, %arg3: memref<16x128xf32, #tpu.memory_space<vmem>>) attributes {dimension_semantics = [#tpu.dimension_semantics<parallel>], iteration_bounds = array<i64: 1>, scalar_prefetch = 0 : i64, scratch_operands = 0 : i64, tpu.core_type = #tpu.core_type<tc>, window_params = [{transform_indices = @transform_0, window_bounds = array<i64: 16, 128>}, {pipeline_mode = #tpu.pipeline_mode<synchronous>, transform_indices = @transform_1, window_bounds = array<i64: 1, 128>}, {transform_indices = @transform_2, window_bounds = array<i64: 16, 128>}]} {
    %c0 = arith.constant 0 : index
    %c0_0 = arith.constant 0 : index
    %0 = vector.load %arg1[%c0, %c0_0] : memref<16x128xf32, #tpu.memory_space<vmem>>, vector<16x128xf32>
    %1 = arith.mulf %0, %0 : vector<16x128xf32>
    %cst = arith.constant dense<0.000000e+00> : vector<16xf32>
    %2 = vector.multi_reduction <add>, %1, %cst [1] : vector<16x128xf32> to vector<16xf32>
    %3 = vector.shape_cast %2 : vector<16xf32> to vector<16x1xf32>
    %cst_1 = arith.constant 1.280000e+02 : f32
    %4 = vector.broadcast %cst_1 : f32 to vector<16x1xf32>
    %5 = arith.divf %3, %4 : vector<16x1xf32>
    %cst_2 = arith.constant 9.99999997E-7 : f32
    %6 = vector.broadcast %cst_2 : f32 to vector<16x1xf32>
    %7 = arith.addf %5, %6 : vector<16x1xf32>
    %8 = math.rsqrt %7 : vector<16x1xf32>
    %9 = vector.broadcast %8 : vector<16x1xf32> to vector<16x128xf32>
    %10 = arith.mulf %0, %9 : vector<16x128xf32>
    %c0_3 = arith.constant 0 : index
    %c0_4 = arith.constant 0 : index
    %11 = vector.load %arg2[%c0_3, %c0_4] : memref<1x128xf32, #tpu.memory_space<vmem>>, vector<1x128xf32>
    %12 = vector.broadcast %11 : vector<1x128xf32> to vector<16x128xf32>
    %13 = arith.mulf %12, %10 : vector<16x128xf32>
    %c0_5 = arith.constant 0 : index
    %c0_6 = arith.constant 0 : index
    %14 = vector.load %arg3[%c0_5, %c0_6] : memref<16x128xf32, #tpu.memory_space<vmem>>, vector<16x128xf32>
    tpu.vector_store %arg3[%c0_5, %c0_6], %13 {strides = array<i32>} : memref<16x128xf32, #tpu.memory_space<vmem>>, vector<16x128xf32>,
    return
  }
  func.func @transform_0(%arg0: i32) -> (i32, i32) {
    %c0_i32 = arith.constant 0 : i32
    %c0_i32_0 = arith.constant 0 : i32
    return %arg0, %c0_i32 : i32, i32
  }
  func.func @transform_1(%arg0: i32) -> (i32, i32) {
    %c0_i32 = arith.constant 0 : i32
    %c0_i32_0 = arith.constant 0 : i32
    %c0_i32_1 = arith.constant 0 : i32
    return %c0_i32, %c0_i32_0 : i32, i32
  }
  func.func @transform_2(%arg0: i32) -> (i32, i32) {
    %c0_i32 = arith.constant 0 : i32
    %c0_i32_0 = arith.constant 0 : i32
    return %arg0, %c0_i32 : i32, i32
  }
}

</mosaic_0001>

<llo_original>
// kernel: tpu_custom_call.1
$region0: #{tpu_custom_call.1}
  #allocation0 [shape = 'u32[]', space=smem, size = 0x4, offset = 0x4, fixed_abs, tag = 'smem constant byte address 0x4 - core index']
  #allocation1 [shape = 'u32[144,128]{1,0:T(1,128)}', space=vmem, size = 0x12000, scoped, tag = 'internal scratch']
  %s0 = inlined_call_operand.hbm [shape: f32[16,128], index: 0, kind: input, shape index: {}]
  %s1 = inlined_call_operand.vmem [shape: f32[1,128], index: 1, kind: input, shape index: {}]
  %s2 = inlined_call_operand.hbm [shape: f32[16,128], index: 2, kind: output, shape index: {}]
  %s3 = sld [smem:[#allocation0]]
  $region22: #{tpu_custom_call.1} parent=0
    _
  %s5 = ssub.s32 1, %s3
  %s6 = scalar_select 0, %s5, %s3
  $region1: #{tpu_custom_call.1} parent=0
    #allocation2 [shape = 'u8[8192]{0}', space=vmem, size = 0x2000, scoped, tag = 'input window, operand 0, single buffered']
    #allocation3 [shape = 's32[1]{0}', space=sflag, size = 0x4, scoped, tag = 'scoped memory for tpu_custom_call.1']
    #allocation4 [shape = 's32[1]{0}', space=sflag, size = 0x4, scoped, tag = 'scoped memory for tpu_custom_call.1']
    #allocation5 [shape = 'u8[8192]{0}', space=vmem, size = 0x2000, scoped, tag = 'output window, operand 0, single buffered']
    %7 = vsyncpa [#allocation3], 0
    %8 = vsyncpa [#allocation4], 0
    // Predicated region
    $region2: #{tpu_custom_call.1} parent=1 // pred_check
      _
    $region3: #{tpu_custom_call.1} parent=1 // pred_check_branch
      %10 = sbr.rel (0) target = $region5
    $region4: #{tpu_custom_call.1} parent=1 // pred_region
      %s12 = ssub.s32 256, 256
      %13 = vsyncadd [#allocation3], %s12
      %s14 = sshll.u32 [#allocation2], 4
      %s15 = int_to_ptr.vmem [resolvable:$true] %s14
      %20 = dma.hbm_to_vmem [thread:$0]  %s0, 256, %s15, [#allocation3], 128, 128, 8
    $region5: #{tpu_custom_call.1} parent=1 // pred_fallthru
      _
    // Predicated region
    $region6: #{tpu_custom_call.1} parent=1 // pred_check
      _
    $region7: #{tpu_custom_call.1} parent=1 // pred_check_branch
      %22 = sbr.rel (0) target = $region9
    $region8: #{tpu_custom_call.1} parent=1 // pred_region
      _
    $region9: #{tpu_custom_call.1} parent=1 // pred_fallthru
      _
    // Predicated region
    $region10: #{tpu_custom_call.1} parent=1 // pred_check
      _
    $region11: #{tpu_custom_call.1} parent=1 // pred_check_branch
      %24 = sbr.rel (0) target = $region13
    $region12: #{tpu_custom_call.1} parent=1 // pred_region
      %25 = dma.done [#allocation3], 256
    $region13: #{tpu_custom_call.1} parent=1 // pred_fallthru
      _
    %v26 = vld [vmem:[#allocation2] sm:$0xff]
    %v27 = vld [vmem:[#allocation2 + $0x8] sm:$0xff]
    %v28 = vmul.f32 %v26, %v26
    %v29 = vmul.f32 %v27, %v27
    %30 = vadd.xlane.f32.xlu0 %v28
    %v31 = vpop.xlane.xlu0 %30
    %32 = vadd.xlane.f32.xlu0 %v29
    %v33 = vpop.xlane.xlu0 %32
    %v34 = vrcp.pop 128.0
    %v35 = vmul.f32 %v31, %v34
    %v36 = vmul.f32 %v33, %v34
    %v37 = vadd.f32 %v35, 1e-06
    %v38 = vadd.f32 %v36, 1e-06
    %v39 = vrsqrt.pop %v37
    %v40 = vrsqrt.pop %v38
    %v41 = vmul.f32 %v26, %v39
    %v42 = vmul.f32 %v27, %v40
    %v43 = vld [vmem:[%s1] sm:$0x1]
    %v45 = vlaneseq
    %v46 = vshrl.u32 %v45, 7
    %v47 = vsub.s32 0, %v46
    %v48 = vrot.slane %v43, %v47
    %v50 = vmul.f32 %v48, %v41
    %v51 = vmul.f32 %v48, %v42
    %52 = vst [vmem:[#allocation5] sm:$0xff] %v50
    %53 = vst [vmem:[#allocation5 + $0x8] sm:$0xff] %v51
    // Predicated region
    $region14: #{tpu_custom_call.1} parent=1 // pred_check
      _
    $region15: #{tpu_custom_call.1} parent=1 // pred_check_branch
      %55 = sbr.rel (0) target = $region17
    $region16: #{tpu_custom_call.1} parent=1 // pred_region
      %s57 = ssub.s32 256, 256
      %58 = vsyncadd [#allocation4], %s57
      %s59 = sshll.u32 [#allocation5], 4
      %s60 = int_to_ptr.vmem [resolvable:$true] %s59
      %65 = dma.vmem_to_hbm [thread:$0]  %s60, 256, %s2, [#allocation4], 128, 128, 8
    $region17: #{tpu_custom_call.1} parent=1 // pred_fallthru
      _
    // Predicated region
    $region18: #{tpu_custom_call.1} parent=1 // pred_check
      _
    $region19: #{tpu_custom_call.1} parent=1 // pred_check_branch
      %67 = sbr.rel (0) target = $region21
    $region20: #{tpu_custom_call.1} parent=1 // pred_region
      %68 = dma.done [#allocation4], 256
    $region21: #{tpu_custom_call.1} parent=1 // pred_fallthru
      _
    %69 = vsyncpa [#allocation3], 1
    %70 = vsyncpa [#allocation4], 1

</llo_original>
